<compile_context>
chip_gen: v5e
topology: v5e:2x2
jax: 0.10.0
libtpu: 0.0.40
codegen_flags: <defaults>
</compile_context>

<pallas_src>
import functools

import jax
import jax.numpy as jnp
from jax.experimental import pallas as pl
from jax.experimental.pallas import tpu as pltpu


def _round_up(x, m):
    return ((x + m - 1) // m) * m


def _pick_tile_h(h, w, max_lanes=2048):
    """Largest divisor of h with a 128-multiple lane width, preferring >=2
    grid steps so both v7x TensorCores get work (no-op on v5e/v6e)."""
    divs = [t for t in range(1, h + 1) if h % t == 0]
    ok = [t for t in divs if (t * w) % 128 == 0 and t * w <= max_lanes]
    if not ok:
        return h                      # single full-extent tile (always legal)
    multi = [t for t in ok if h // t >= 2]
    return max(multi) if multi else max(ok)


# ----------------------------------------------------------------------------
# Kernel 1: fused 3x3 SAME conv + bias + ReLU, one row-tile per grid step.
#   x_ref: (Cin, H+2, W+2)        bf16 padded channel-planar image (resident)
#   w_ref: (Cout_pad, K_pad)      bf16 weights (K padded 27->32, Cout->mult of 8)
#   b_ref: (Cout_pad, 1)          f32 bias (broadcast over lanes)
#   o_ref: (Cout_pad, tile_h*W)   f32 channel-major output tile (NCHW-ready)
# ----------------------------------------------------------------------------
def conv3x3_kernel(x_ref, w_ref, b_ref, o_ref, *, tile_h, im_w, cin, k_pad):
    row0 = pl.program_id(0) * tile_h
    if tile_h % 8 == 0:
        row0 = pl.multiple_of(row0, 8)
    # (Cin, tile_h+2, W+2) halo window sliced from the resident padded image.
    xw = x_ref[:, pl.ds(row0, tile_h + 2), :]

    lanes = tile_h * im_w
    # In-kernel im2col: 9 shifted slabs, K order (di, dj, c), spatial on lanes.
    slabs = [xw[:, di:di + tile_h, dj:dj + im_w].reshape(cin, lanes)
             for di in range(3) for dj in range(3)]
    pad = k_pad - 9 * cin
    if pad > 0:
        slabs.append(jnp.zeros((pad, lanes), xw.dtype))
    patches = jnp.concatenate(slabs, axis=0)               # (K_pad, tile_h*W)

    # Weights as LHS -> result is already (Cout_pad, tile_h*W); no acc.T.
    acc = jnp.dot(w_ref[...], patches, preferred_element_type=jnp.float32)
    o_ref[...] = jnp.maximum(acc + b_ref[...], 0.0).astype(o_ref.dtype)


def conv_backbone(image_hwc, w_flat, b, *, tile_h=None):
    """image_hwc: (H, W, Cin) -> fmap (1, Cout, H, W) (NCHW, detectron-like)."""
    h, w, cin = image_hwc.shape
    k, cout = w_flat.shape                            # k = 9 * Cin (= 27)
    if tile_h is None:
        tile_h = _pick_tile_h(h, w)
    assert h % tile_h == 0
    num_tiles = h // tile_h

    k_pad = _round_up(k, 8)                           # 27 -> 32
    cout_pad = _round_up(cout, 8)                     # sublane axis: 8 suffices

    # Glue (plain JAX): SAME pad + channel-planar bf16. No halo tile stacking.
    x_chw = jnp.pad(image_hwc, ((1, 1), (1, 1), (0, 0))) \
        .transpose(2, 0, 1).astype(jnp.bfloat16)      # (Cin, H+2, W+2)

    w_pad = jnp.zeros((cout_pad, k_pad), jnp.bfloat16)
    w_pad = w_pad.at[:cout, :k].set(w_flat.T.astype(jnp.bfloat16))
    b_pad = jnp.zeros((cout_pad, 1), jnp.float32)
    b_pad = b_pad.at[:cout, 0].set(b.astype(jnp.float32))

    kernel = functools.partial(conv3x3_kernel, tile_h=tile_h, im_w=w,
                               cin=cin, k_pad=k_pad)

    # VMEM sizing (double-buffered output tile + resident image + params),
    # capped at 48 MiB so it is safe on v7x's 64 MiB physical VMEM.
    vmem_needed = (2 * cout_pad * tile_h * w * 4
                   + 2 * cin * (h + 2) * (w + 2) * 2
                   + 2 * (k_pad * cout_pad * 2 + cout_pad * 4))
    vmem_limit = int(min(48 * 1024 * 1024,
                         max(16 * 1024 * 1024, 2 * vmem_needed)))

    out = pl.pallas_call(
        kernel,
        grid=(num_tiles,),
        in_specs=[
            # Constant index map -> padded image DMA'd once, stays resident.
            pl.BlockSpec((cin, h + 2, w + 2), lambda i: (0, 0, 0)),
            pl.BlockSpec((cout_pad, k_pad), lambda i: (0, 0)),
            pl.BlockSpec((cout_pad, 1), lambda i: (0, 0)),
        ],
        out_specs=pl.BlockSpec((cout_pad, tile_h * w), lambda i: (0, i)),
        # TODO(synk): downstream RoIAlign/head could take bf16 fmap to halve
        # the writeback; kept f32 to match the detectron fmap semantics.
        out_shape=jax.ShapeDtypeStruct((cout_pad, h * w), jnp.float32),
        compiler_params=pltpu.CompilerParams(
            dimension_semantics=("parallel",),        # shard row-tiles on v7x
            vmem_limit_bytes=vmem_limit),
        cost_estimate=pl.CostEstimate(
            flops=2 * h * w * k_pad * cout_pad,
            transcendentals=0,
            bytes_accessed=(x_chw.size * 2 + w_pad.size * 2 + b_pad.size * 4
                            + cout_pad * h * w * 4)),
    )(x_chw, w_pad, b_pad)

    # Metadata-only reshape/slice: output is already channel-major (NCHW).
    fmap = out.reshape(cout_pad, h, w)[:cout][None]   # (1, Cout, H, W)
    return fmap


# ----------------------------------------------------------------------------
# Kernel 2: GenRCNN.forward box post-processing, lane-dense (boxes as (4, N)).
#   boxes_scaled = boxes * im_scale
#   norm_boxes   = boxes_scaled / [W*s, H*s, W*s, H*s]
#   norm_areas   = (x2-x1)*(y2-y1) / (W*s * H*s)
# Divides replaced by exact scalar reciprocals computed once + VPU multiplies.
# ----------------------------------------------------------------------------
def box_post_kernel(boxes_ref, scale_ref, imwh_ref,
                    sboxes_ref, nbox_ref, narea_ref):
    scale = scale_ref[0]
    inv_w = 1.0 / (imwh_ref[0] * scale)              # exact scalar reciprocals
    inv_h = 1.0 / (imwh_ref[1] * scale)
    inv_area = inv_w * inv_h

    b = boxes_ref[...] * scale                       # (4, N_pad) rows x1,y1,x2,y2
    sboxes_ref[...] = b

    # per-row multiplier [1/W, 1/H, 1/W, 1/H] built on the sublane axis
    row = jax.lax.broadcasted_iota(jnp.int32, b.shape, 0)
    nbox_ref[...] = b * jnp.where((row % 2) == 0, inv_w, inv_h)

    widths = b[2:3, :] - b[0:1, :]
    heights = b[3:4, :] - b[1:2, :]
    narea_ref[...] = widths * heights * inv_area


def box_postprocess(boxes, scores, im_scale, im_wh):
    # NOTE: for tiny N this kernel is launch-overhead bound; kept as a Pallas
    # kernel for completeness (it fuses into the same jit either way).
    n = boxes.shape[0]
    n_pad = _round_up(n, 128)                        # lane-dense N

    boxes_t = jnp.zeros((4, n_pad), jnp.float32)
    boxes_t = boxes_t.at[:, :n].set(boxes.astype(jnp.float32).T)

    sboxes_t, nbox_t, narea_t = pl.pallas_call(
        box_post_kernel,
        in_specs=[
            pl.BlockSpec(memory_space=pltpu.MemorySpace.VMEM),
            pl.BlockSpec(memory_space=pltpu.MemorySpace.SMEM),
            pl.BlockSpec(memory_space=pltpu.MemorySpace.SMEM),
        ],
        out_shape=(
            jax.ShapeDtypeStruct((4, n_pad), jnp.float32),
            jax.ShapeDtypeStruct((4, n_pad), jnp.float32),
            jax.ShapeDtypeStruct((1, n_pad), jnp.float32),
        ),
    )(boxes_t,
      jnp.asarray(im_scale, jnp.float32).reshape(1),
      jnp.asarray(im_wh, jnp.float32).reshape(2))

    sboxes = sboxes_t[:, :n].T                       # (N, 4)
    norm_boxes = nbox_t[:, :n].T                     # (N, 4)
    norm_areas = narea_t[:, :n].T                    # (N, 1)

    # glue: boxes_ext = [im_id(=0) | scaled boxes | class scores]
    boxes_ext = jnp.concatenate(
        [jnp.zeros((n, 1), jnp.float32), sboxes, scores.astype(jnp.float32)],
        axis=1)
    return boxes_ext, norm_boxes, norm_areas


# ----------------------------------------------------------------------------
# GenRCNN.forward equivalent: returns (boxes_ext, im_scale, fmap, ...)
# ----------------------------------------------------------------------------
def gen_rcnn_forward(image_hwc, boxes, scores, im_scale, conv_w, conv_b):
    h, w, _ = image_hwc.shape
    fmap = conv_backbone(image_hwc, conv_w, conv_b)   # (1, Cout, H, W)
    im_wh = jnp.array([w, h], jnp.float32)            # image.shape[1], shape[0]
    boxes_ext, norm_boxes, norm_areas = box_postprocess(boxes, scores,
                                                        im_scale, im_wh)
    return boxes_ext, im_scale, fmap, norm_boxes, norm_areas


if __name__ == "__main__":
    key = jax.random.PRNGKey(0)
    k_img, k_w, k_b, k_xy, k_wh, k_sc = jax.random.split(key, 6)

    H = W = 16
    CIN, COUT = 3, 32
    N_BOX, N_CLS = 8, 5
    IM_SCALE = 1.5

    # deterministic synthetic inputs / parameters
    image = jax.random.uniform(k_img, (H, W, CIN), jnp.float32)              # HWC
    conv_w = jax.random.normal(k_w, (3 * 3 * CIN, COUT), jnp.float32) * 0.1
    conv_b = jax.random.normal(k_b, (COUT,), jnp.float32) * 0.01

    # synthetic proposals (original-image coords), guaranteed inside the image
    xy1 = jax.random.uniform(k_xy, (N_BOX, 2), jnp.float32, 0.0, W / 2.0)
    wh = jax.random.uniform(k_wh, (N_BOX, 2), jnp.float32, 1.0, W / 2.0 - 1.0)
    boxes = jnp.concatenate([xy1, xy1 + wh], axis=1)                          # (N,4)
    scores = jax.nn.softmax(jax.random.normal(k_sc, (N_BOX, N_CLS)), axis=-1)

    boxes_ext, im_scale, fmap, norm_boxes, norm_areas = jax.block_until_ready(
        gen_rcnn_forward(image, boxes, scores, IM_SCALE, conv_w, conv_b))

    # --- numerical reference for the conv (same bf16-rounded inputs) ---------
    xp = jnp.pad(image.astype(jnp.bfloat16).astype(jnp.float32),
                 ((1, 1), (1, 1), (0, 0)))
    cols = [xp[i:i + H, j:j + W, :] for i in range(3) for j in range(3)]
    patches_ref = jnp.concatenate(cols, axis=-1).reshape(H * W, 9 * CIN)
    ref = jnp.maximum(
        patches_ref @ conv_w.astype(jnp.bfloat16).astype(jnp.float32) + conv_b, 0.0)
    ref_chw = ref.reshape(H, W, COUT).transpose(2, 0, 1)[None]
    assert bool(jnp.allclose(fmap, ref_chw, atol=1e-2, rtol=1e-2))

    # replicate GenRCNN.forward's sanity asserts
    assert boxes_ext.shape == (N_BOX, 1 + 4 + N_CLS)
    assert fmap.shape == (1, COUT, H, W)
    assert bool(jnp.all(norm_boxes >= 0.0)) and bool(jnp.all(norm_boxes <= 1.0))
    assert bool(jnp.all(norm_areas > 0.0)) and bool(jnp.all(norm_areas <= 1.0))
    # column 0 is the image-id column of zeros, 1:5 scaled boxes, 5: scores
    assert bool(jnp.all(boxes_ext[:, 0] == 0.0))
    assert bool(jnp.allclose(boxes_ext[:, 1:5], boxes * IM_SCALE, atol=1e-5))

    print("KERNEL_OK")
</pallas_src>

<mosaic_0001>
module attributes {stable_mosaic.version = 11 : i64} {
  func.func @conv3x3_kernel(%arg0: i32, %arg1: memref<3x18x18xbf16, #tpu.memory_space<vmem>>, %arg2: memref<32x32xbf16, #tpu.memory_space<vmem>>, %arg3: memref<32x1xf32, #tpu.memory_space<vmem>>, %arg4: memref<32x128xf32, #tpu.memory_space<vmem>>) attributes {dimension_semantics = [#tpu.dimension_semantics<parallel>], iteration_bounds = array<i64: 2>, scalar_prefetch = 0 : i64, scratch_operands = 0 : i64, tpu.core_type = #tpu.core_type<tc>, window_params = [{pipeline_mode = #tpu.pipeline_mode<synchronous>, transform_indices = @transform_0, window_bounds = array<i64: 3, 18, 18>}, {pipeline_mode = #tpu.pipeline_mode<synchronous>, transform_indices = @transform_1, window_bounds = array<i64: 32, 32>}, {pipeline_mode = #tpu.pipeline_mode<synchronous>, transform_indices = @transform_2, window_bounds = array<i64: 32, 1>}, {transform_indices = @transform_3, window_bounds = array<i64: 32, 128>}]} {
    %c8_i32 = arith.constant 8 : i32
    %0 = arith.muli %arg0, %c8_i32 : i32
    %1 = tpu.assume_multiple %0, 8 : i32
    %c0 = arith.constant 0 : index
    %2 = arith.index_cast %1 : i32 to index
    %c0_0 = arith.constant 0 : index
    %3 = vector.load %arg1[%c0, %2, %c0_0] : memref<3x18x18xbf16, #tpu.memory_space<vmem>>, vector<3x10x18xbf16>
    %4 = vector.extract_strided_slice %3 {offsets = [0, 0, 0], sizes = [3, 8, 16], strides = [1, 1, 1]} : vector<3x10x18xbf16> to vector<3x8x16xbf16>
    %5 = vector.shape_cast %4 : vector<3x8x16xbf16> to vector<3x128xbf16>
    %6 = vector.extract_strided_slice %3 {offsets = [0, 0, 1], sizes = [3, 8, 16], strides = [1, 1, 1]} : vector<3x10x18xbf16> to vector<3x8x16xbf16>
    %7 = vector.shape_cast %6 : vector<3x8x16xbf16> to vector<3x128xbf16>
    %8 = vector.extract_strided_slice %3 {offsets = [0, 0, 2], sizes = [3, 8, 16], strides = [1, 1, 1]} : vector<3x10x18xbf16> to vector<3x8x16xbf16>
    %9 = vector.shape_cast %8 : vector<3x8x16xbf16> to vector<3x128xbf16>
    %10 = vector.extract_strided_slice %3 {offsets = [0, 1, 0], sizes = [3, 8, 16], strides = [1, 1, 1]} : vector<3x10x18xbf16> to vector<3x8x16xbf16>
    %11 = vector.shape_cast %10 : vector<3x8x16xbf16> to vector<3x128xbf16>
    %12 = vector.extract_strided_slice %3 {offsets = [0, 1, 1], sizes = [3, 8, 16], strides = [1, 1, 1]} : vector<3x10x18xbf16> to vector<3x8x16xbf16>
    %13 = vector.shape_cast %12 : vector<3x8x16xbf16> to vector<3x128xbf16>
    %14 = vector.extract_strided_slice %3 {offsets = [0, 1, 2], sizes = [3, 8, 16], strides = [1, 1, 1]} : vector<3x10x18xbf16> to vector<3x8x16xbf16>
    %15 = vector.shape_cast %14 : vector<3x8x16xbf16> to vector<3x128xbf16>
    %16 = vector.extract_strided_slice %3 {offsets = [0, 2, 0], sizes = [3, 8, 16], strides = [1, 1, 1]} : vector<3x10x18xbf16> to vector<3x8x16xbf16>
    %17 = vector.shape_cast %16 : vector<3x8x16xbf16> to vector<3x128xbf16>
    %18 = vector.extract_strided_slice %3 {offsets = [0, 2, 1], sizes = [3, 8, 16], strides = [1, 1, 1]} : vector<3x10x18xbf16> to vector<3x8x16xbf16>
    %19 = vector.shape_cast %18 : vector<3x8x16xbf16> to vector<3x128xbf16>
    %20 = vector.extract_strided_slice %3 {offsets = [0, 2, 2], sizes = [3, 8, 16], strides = [1, 1, 1]} : vector<3x10x18xbf16> to vector<3x8x16xbf16>
    %21 = vector.shape_cast %20 : vector<3x8x16xbf16> to vector<3x128xbf16>
    %cst = arith.constant 0.000000e+00 : bf16
    %22 = vector.broadcast %cst : bf16 to vector<5x128xbf16>
    %23 = tpu.concatenate %5, %7, %9, %11, %13, %15, %17, %19, %21, %22 in 0 : vector<3x128xbf16>, vector<3x128xbf16>, vector<3x128xbf16>, vector<3x128xbf16>, vector<3x128xbf16>, vector<3x128xbf16>, vector<3x128xbf16>, vector<3x128xbf16>, vector<3x128xbf16>, vector<5x128xbf16> -> vector<32x128xbf16>
    %c0_1 = arith.constant 0 : index
    %c0_2 = arith.constant 0 : index
    %24 = vector.load %arg2[%c0_1, %c0_2] : memref<32x32xbf16, #tpu.memory_space<vmem>>, vector<32x32xbf16>
    %cst_3 = arith.constant dense<0.000000e+00> : vector<32x128xf32>
    %25 = tpu.matmul %24, %23, %cst_3 {dimension_numbers = #tpu.dot_dimension_numbers<[1], [0], [0], [1], [0, 0, 1, 1], [], []>} : vector<32x32xbf16>, vector<32x128xbf16>, vector<32x128xf32> -> vector<32x128xf32>
    %c0_4 = arith.constant 0 : index
    %c0_5 = arith.constant 0 : index
    %26 = vector.load %arg3[%c0_4, %c0_5] : memref<32x1xf32, #tpu.memory_space<vmem>>, vector<32x1xf32>
    %27 = vector.broadcast %26 : vector<32x1xf32> to vector<32x128xf32>
    %28 = arith.addf %25, %27 : vector<32x128xf32>
    %cst_6 = arith.constant 0.000000e+00 : f32
    %29 = vector.broadcast %cst_6 : f32 to vector<32x128xf32>
    %30 = arith.maximumf %28, %29 : vector<32x128xf32>
    %c0_7 = arith.constant 0 : index
    %c0_8 = arith.constant 0 : index
    %31 = vector.load %arg4[%c0_7, %c0_8] : memref<32x128xf32, #tpu.memory_space<vmem>>, vector<32x128xf32>
    tpu.vector_store %arg4[%c0_7, %c0_8], %30 {strides = array<i32>} : memref<32x128xf32, #tpu.memory_space<vmem>>, vector<32x128xf32>,
    return
  }
  func.func @transform_0(%arg0: i32) -> (i32, i32, i32) {
    %c0_i32 = arith.constant 0 : i32
    %c0_i32_0 = arith.constant 0 : i32
    %c0_i32_1 = arith.constant 0 : i32
    %c0_i32_2 = arith.constant 0 : i32
    return %c0_i32, %c0_i32_0, %c0_i32_1 : i32, i32, i32
  }
  func.func @transform_1(%arg0: i32) -> (i32, i32) {
    %c0_i32 = arith.constant 0 : i32
    %c0_i32_0 = arith.constant 0 : i32
    %c0_i32_1 = arith.constant 0 : i32
    return %c0_i32, %c0_i32_0 : i32, i32
  }
  func.func @transform_2(%arg0: i32) -> (i32, i32) {
    %c0_i32 = arith.constant 0 : i32
    %c0_i32_0 = arith.constant 0 : i32
    %c0_i32_1 = arith.constant 0 : i32
    return %c0_i32, %c0_i32_0 : i32, i32
  }
  func.func @transform_3(%arg0: i32) -> (i32, i32) {
    %c0_i32 = arith.constant 0 : i32
    %c0_i32_0 = arith.constant 0 : i32
    return %c0_i32, %arg0 : i32, i32
  }
}

</mosaic_0001>

<llo_original>
// kernel: tpu_custom_call.1
$region0: #{tpu_custom_call.1}
  #allocation0 [shape = 'u32[]', space=smem, size = 0x4, offset = 0x4, fixed_abs, tag = 'smem constant byte address 0x4 - core index']
  #allocation1 [shape = 'u32[72,128]{1,0:T(1,128)}', space=vmem, size = 0x9000, scoped, tag = 'internal scratch']
  %s0 = inlined_call_operand.hbm [shape: bf16[3,18,18], index: 0, kind: input, shape index: {}]
  %s1 = inlined_call_operand.vmem [shape: bf16[32,32], index: 1, kind: input, shape index: {}]
  %s2 = inlined_call_operand.vmem [shape: f32[32,1], index: 2, kind: input, shape index: {}]
  %s3 = inlined_call_operand.hbm [shape: f32[32,256], index: 3, kind: output, shape index: {}]
  %s4 = sld [smem:[#allocation0]]
  $region49: #{tpu_custom_call.1} parent=0
    _
  %s6 = ssub.s32 1, %s4
  %s7 = scalar_select 0, %s6, %s4
  $region1: #{tpu_custom_call.1} parent=0
    #allocation2 [shape = 'u8[18432]{0}', space=vmem, size = 0x4800, scoped, tag = 'input window, operand 0, single buffered']
    #allocation3 [shape = 's32[2]{0}', space=sflag, size = 0x8, scoped, tag = 'scoped memory for tpu_custom_call.1']
    #allocation4 [shape = 's32[2]{0}', space=sflag, size = 0x8, scoped, tag = 'scoped memory for tpu_custom_call.1']
    #allocation5 [shape = 'u8[32768]{0}', space=vmem, size = 0x8000, scoped, tag = 'output window, operand 0']
    %8 = vsyncpa [#allocation3], 0
    %9 = vsyncpa [#allocation4], 0
    %s10 = scalar_lea.sflag [#allocation4], 1
    %11 = vsyncpa %s10, 0
    loop: start=0, step=1, limit=4
    $region2: #{tpu_custom_call.1} parent=1 // loop_pre_header
      _
    $region3: #{tpu_custom_call.1} parent=1 // loop_header
      %s13 = sphi 0, %s17
      %p14 = scmp.ge.s32.totalorder %s13, 4
      %s21 = sphi 0, %s21
      %s23 = sphi 0, %s21
      %s24 = sphi 0, %s23
      %s38 = sphi 0, %s24
      %s42 = sphi 0, %s42
      %s44 = sphi 0, %s42
      %s45 = sphi 0, %s44
      %s59 = sphi 0, %s45
      %s63 = sphi 0, %s63
      %s65 = sphi 0, %s63
      %s66 = sphi 0, %s65
      %s80 = sphi 0, %s66
      %s86 = sphi 0, %s88
      %s89 = sphi 0, %s86
      %s90 = sphi 0, %s89
      %s106 = sphi 0, %s90
    $region4: #{tpu_custom_call.1} parent=1 // loop_header_branch
      %16 = sbr.rel (%p14) target = $region8
    $region5: #{tpu_custom_call.1} parent=1 // loop_body
      %s18 = ssub.s32 %s13, 1
      %s19 = ssub.s32 %s13, 2
      %s20 = sadd.s32 %s13, 1
      %s22 = sadd.s32 %s21, 1
      %p25 = scmp.eq.s32.totalorder %s13, 1
      %p26 = scmp.ne.s32.totalorder %s21, %s23
      %p27 = scmp.eq.s32.totalorder %s13, 0
      %p28 = por %p26, %p27
      %p29 = scmp.ne.s32.totalorder %s21, %s23
      %p30 = scmp.eq.s32.totalorder %s18, 1
      %p31 = por %p29, %p30
      %p32 = scmp.ne.s32.totalorder %s23, %s24
      %p33 = scmp.eq.s32.totalorder %s18, 0
      %p34 = por %p32, %p33
      %p35 = scmp.ne.s32.totalorder %s23, %s24
      %p36 = scmp.eq.s32.totalorder %s19, 1
      %p37 = por %p35, %p36
      %p39 = scmp.ne.s32.totalorder %s24, %s38
      %p40 = scmp.eq.s32.totalorder %s19, 0
      %p41 = por %p39, %p40
      %s43 = sadd.s32 %s42, 1
      %p46 = scmp.eq.s32.totalorder %s13, 1
      %p47 = scmp.ne.s32.totalorder %s42, %s44
      %p48 = scmp.eq.s32.totalorder %s13, 0
      %p49 = por %p47, %p48
      %p50 = scmp.ne.s32.totalorder %s42, %s44
      %p51 = scmp.eq.s32.totalorder %s18, 1
      %p52 = por %p50, %p51
      %p53 = scmp.ne.s32.totalorder %s44, %s45
      %p54 = scmp.eq.s32.totalorder %s18, 0
      %p55 = por %p53, %p54
      %p56 = scmp.ne.s32.totalorder %s44, %s45
      %p57 = scmp.eq.s32.totalorder %s19, 1
      %p58 = por %p56, %p57
      %p60 = scmp.ne.s32.totalorder %s45, %s59
      %p61 = scmp.eq.s32.totalorder %s19, 0
      %p62 = por %p60, %p61
      %s64 = sadd.s32 %s63, 1
      %p67 = scmp.eq.s32.totalorder %s13, 1
      %p68 = scmp.ne.s32.totalorder %s63, %s65
      %p69 = scmp.eq.s32.totalorder %s13, 0
      %p70 = por %p68, %p69
      %p71 = scmp.ne.s32.totalorder %s63, %s65
      %p72 = scmp.eq.s32.totalorder %s18, 1
      %p73 = por %p71, %p72
      %p74 = scmp.ne.s32.totalorder %s65, %s66
      %p75 = scmp.eq.s32.totalorder %s18, 0
      %p76 = por %p74, %p75
      %p77 = scmp.ne.s32.totalorder %s65, %s66
      %p78 = scmp.eq.s32.totalorder %s19, 1
      %p79 = por %p77, %p78
      %p81 = scmp.ne.s32.totalorder %s66, %s80
      %p82 = scmp.eq.s32.totalorder %s19, 0
      %p83 = por %p81, %p82
      %s84 = ssub.s32 %s13, %s20
      %p85 = scmp.eq.s32.totalorder %s84, 0
      %s87 = sadd.s32 %s86, 1
      %s88 = scalar_select %p85, %s86, %s87
      %p91 = pneg %p85
      %p92 = scmp.eq.s32.totalorder %s13, 1
      %p93 = por %p91, %p92
      %p94 = scmp.ne.s32.totalorder %s86, %s89
      %p95 = scmp.eq.s32.totalorder %s13, 0
      %p96 = por %p94, %p95
      %p97 = scmp.ne.s32.totalorder %s86, %s89
      %p98 = scmp.eq.s32.totalorder %s18, 1
      %p99 = por %p97, %p98
      %p100 = scmp.ne.s32.totalorder %s89, %s90
      %p101 = scmp.eq.s32.totalorder %s18, 0
      %p102 = por %p100, %p101
      %p103 = scmp.ne.s32.totalorder %s89, %s90
      %p104 = scmp.eq.s32.totalorder %s19, 1
      %p105 = por %p103, %p104
      %p107 = scmp.ne.s32.totalorder %s90, %s106
      %p108 = scmp.eq.s32.totalorder %s19, 0
      %p109 = por %p107, %p108
      %p110 = scmp.le.s32.totalorder 1, %s13
      %p111 = scmp.lt.s32.totalorder %s13, 3
      %p112 = pnand %p110, %p111
      %p113 = pneg %p112
      // Predicated region
      $region9: #{tpu_custom_call.1} parent=5 // pred_check
        _
      $region10: #{tpu_custom_call.1} parent=5 // pred_check_branch
        %115 = sbr.rel (%p112) target = $region12
      $region11: #{tpu_custom_call.1} parent=5 // pred_region
        %s116 = ssub.s32 %s13, 1
        // Predicated region
        $region13: #{tpu_custom_call.1} parent=11 // pred_check
          %p117 = pneg %p34
        $region14: #{tpu_custom_call.1} parent=11 // pred_check_branch
          %119 = sbr.rel (%p117) target = $region16
        $region15: #{tpu_custom_call.1} parent=11 // pred_region
          %121 = vsyncadd [#allocation3], 0
          %s122 = sshll.u32 %s0, 4
          %s123 = int_to_ptr.hbm [resolvable:$true] %s122
          %s124 = sshll.u32 [#allocation2], 4
          %s125 = int_to_ptr.vmem [resolvable:$true] %s124
          %130 = dma.hbm_to_vmem [thread:$0]  %s123, 576, %s125, [#allocation3], 64, 64, 4
        $region16: #{tpu_custom_call.1} parent=11 // pred_fallthru
          _
        // Predicated region
        $region17: #{tpu_custom_call.1} parent=11 // pred_check
          %p131 = pneg %p55
        $region18: #{tpu_custom_call.1} parent=11 // pred_check_branch
          %133 = sbr.rel (%p131) target = $region20
        $region19: #{tpu_custom_call.1} parent=11 // pred_region
          _
        $region20: #{tpu_custom_call.1} parent=11 // pred_fallthru
          _
        // Predicated region
        $region21: #{tpu_custom_call.1} parent=11 // pred_check
          %p134 = pneg %p76
        $region22: #{tpu_custom_call.1} parent=11 // pred_check_branch
          %136 = sbr.rel (%p134) target = $region24
        $region23: #{tpu_custom_call.1} parent=11 // pred_region
          _
        $region24: #{tpu_custom_call.1} parent=11 // pred_fallthru
          _
      $region12: #{tpu_custom_call.1} parent=5 // pred_fallthru
        _
      %p137 = scmp.lt.s32.totalorder %s13, 2
      // Predicated region
      $region25: #{tpu_custom_call.1} parent=5 // pred_check
        %p138 = pneg %p137
      $region26: #{tpu_custom_call.1} parent=5 // pred_check_branch
        %140 = sbr.rel (%p138) target = $region28
      $region27: #{tpu_custom_call.1} parent=5 // pred_region
        _
      $region28: #{tpu_custom_call.1} parent=5 // pred_fallthru
        _
      %p141 = scmp.le.s32.totalorder 1, %s13
      %p142 = scmp.lt.s32.totalorder %s13, 3
      %p143 = pnand %p141, %p142
      %p144 = pneg %p143
      // Predicated region
      $region29: #{tpu_custom_call.1} parent=5 // pred_check
        _
      $region30: #{tpu_custom_call.1} parent=5 // pred_check_branch
        %146 = sbr.rel (%p143) target = $region32
      $region31: #{tpu_custom_call.1} parent=5 // pred_region
        %s147 = ssub.s32 %s13, 1
        // Predicated region
        $region33: #{tpu_custom_call.1} parent=31 // pred_check
          %p148 = pneg %p34
        $region34: #{tpu_custom_call.1} parent=31 // pred_check_branch
          %150 = sbr.rel (%p148) target = $region36
        $region35: #{tpu_custom_call.1} parent=31 // pred_region
          %152 = dma.done [#allocation3], 576
        $region36: #{tpu_custom_call.1} parent=31 // pred_fallthru
          _
        %p153 = pneg %p34
        %p154 = pneg %p31
        %p155 = pneg %p55
        %p156 = pneg %p52
        %p157 = pneg %p76
        %p158 = pneg %p73
        %p159 = pneg %p102
        %p160 = pneg %p99
        %s161 = sand.u32 %s89, 1
        %s162 = scalar_lea.sflag [#allocation4], %s161
        %s163 = sand.u32 %s89, 1
        %s164 = smul.addr %s163, 32
        %s165 = scalar_lea.vmem [#allocation5], %s164
        %s167 = smul.u32 %s18, 8
        %s168 = sshra.s32 %s167, 3
        %s169 = sand.u32 %s167, 7
        %s170 = smul.addr %s168, 4
        %s171 = scalar_lea.vmem [#allocation2], %s170
        %v172 = vld [vmem:[%s171] sm:$0xf]
        %v173 = vld [vmem:[%s171 + $0x4] sm:$0x1]
        %v174 = vld [vmem:[%s171 + $0xc] sm:$0xf]
        %v175 = vld [vmem:[%s171 + $0x10] sm:$0x1]
        %v176 = vld [vmem:[%s171 + $0x18] sm:$0xf]
        %v177 = vld [vmem:[%s171 + $0x1c] sm:$0x1]
        %v180 = vpack.i.b16 %v174, %v172
        %v181 = vshrl.u32 %v172, 16
        %v182 = vshrl.u32 %v174, 16
        %v183 = vpack.i.b16 %v182, %v181
        %v186 = vpack.i.b16 0, %v176
        %v187 = vshrl.u32 %v176, 16
        %v188 = vshrl.u32 0, 16
        %v189 = vpack.i.b16 %v188, %v187
        %v192 = vunpack.c.l.s4 1983009808
        %v193 = vunpack.c.0.s8 %v192
        %v194 = vperm.slane %v180, %v193
        %v197 = vunpack.c.l.s4 1983009808
        %v198 = vunpack.c.0.s8 %v197
        %v199 = vperm.slane %v186, %v198
        %v200 = vrot.slane %v199, 4
        %vm201 = vcmask 1047556
        %v202 = vsel %vm201, %v200, %v194
        %v203 = vrot.slane %v194, 4
        %v204 = vsel %vm201, %v199, %v203
        %v206 = vunpack.c.l.s4 1934713408
        %v207 = vunpack.c.0.s8 %v206
        %v208 = vperm.slane %v202, %v207
        %v210 = vunpack.c.l.s4 1934713408
        %v211 = vunpack.c.0.s8 %v210
        %v212 = vperm.slane %v204, %v211
        %v213 = vrot.slane %v208, 4
        %v214 = vsel %vm201, 0, %v213
        %v215 = vrot.slane %v212, 4
        %v216 = vsel %vm201, 0, %v215
        %v219 = vunpack.c.l.s4 1983009808
        %v220 = vunpack.c.0.s8 %v219
        %v221 = vperm.slane %v183, %v220
        %v224 = vunpack.c.l.s4 1983009808
        %v225 = vunpack.c.0.s8 %v224
        %v226 = vperm.slane %v189, %v225
        %v227 = vrot.slane %v226, 4
        %v228 = vsel %vm201, %v227, %v221
        %v229 = vrot.slane %v221, 4
        %v230 = vsel %vm201, %v226, %v229
        %v232 = vunpack.c.l.s4 1934713408
        %v233 = vunpack.c.0.s8 %v232
        %v234 = vperm.slane %v228, %v233
        %v236 = vunpack.c.l.s4 1934713408
        %v237 = vunpack.c.0.s8 %v236
        %v238 = vperm.slane %v230, %v237
        %v239 = vrot.slane %v234, 4
        %v240 = vsel %vm201, 0, %v239
        %v241 = vrot.slane %v238, 4
        %v242 = vsel %vm201, 0, %v241
        %v244 = vunpack.c.l.b16 %v234
        %v245 = vpack.c.b16 %v244, %v244
        %246 = vrot.lane.b32.xlu0 %v245, 16
        %v247 = vpop.permute.xlu0 %246
        %v249 = vunpack.c.l.b16 %v214
        %v250 = vpack.c.b16 %v249, %v249
        %251 = vrot.lane.b32.xlu0 %v250, 32
        %v252 = vpop.permute.xlu0 %251
        %v254 = vunpack.c.l.b16 %v240
        %v255 = vpack.c.b16 %v254, %v254
        %256 = vrot.lane.b32.xlu0 %v255, 48
        %v257 = vpop.permute.xlu0 %256
        %v259 = vunpack.c.l.b16 %v212
        %v260 = vpack.c.b16 %v259, %v259
        %261 = vrot.lane.b32.xlu0 %v260, 64
        %v262 = vpop.permute.xlu0 %261
        %v264 = vunpack.c.l.b16 %v238
        %v265 = vpack.c.b16 %v264, %v264
        %266 = vrot.lane.b32.xlu0 %v265, 80
        %v267 = vpop.permute.xlu0 %266
        %v269 = vunpack.c.l.b16 %v216
        %v270 = vpack.c.b16 %v269, %v269
        %271 = vrot.lane.b32.xlu0 %v270, 96
        %v272 = vpop.permute.xlu0 %271
        %v274 = vunpack.c.l.b16 %v242
        %v275 = vpack.c.b16 %v274, %v274
        %276 = vrot.lane.b32.xlu0 %v275, 112
        %v277 = vpop.permute.xlu0 %276
        %vm278 = vcmask 130048
        %v281 = vsel %vm278, %v208, %v247
        %vm282 = vcmask 261120
        %v284 = vsel %vm282, %v281, %v252
        %vm285 = vcmask 392192
        %v287 = vsel %vm285, %v284, %v257
        %vm288 = vcmask 523264
        %v290 = vsel %vm288, %v287, %v262
        %vm291 = vcmask 654336
        %v293 = vsel %vm291, %v290, %v267
        %vm294 = vcmask 785408
        %v296 = vsel %vm294, %v293, %v272
        %vm297 = vcmask 916480
        %v299 = vsel %vm297, %v296, %v277
        %304 = vrot.lane.b32.xlu0 %v172, 127
        %v305 = vpop.permute.xlu0 %304
        %306 = vrot.lane.b32.xlu0 %v174, 127
        %v307 = vpop.permute.xlu0 %306
        %308 = vrot.lane.b32.xlu0 %v176, 127
        %v309 = vpop.permute.xlu0 %308
        %v312 = vpack.i.b16 %v307, %v305
        %v313 = vshrl.u32 %v305, 16
        %v314 = vshrl.u32 %v307, 16
        %v315 = vpack.i.b16 %v314, %v313
        %v317 = vpack.i.b16 0, %v309
        %v318 = vshrl.u32 %v309, 16
        %v319 = vpack.i.b16 %v188, %v318
        %v322 = vunpack.c.l.s4 1983009808
        %v323 = vunpack.c.0.s8 %v322
        %v324 = vperm.slane %v312, %v323
        %v327 = vunpack.c.l.s4 1983009808
        %v328 = vunpack.c.0.s8 %v327
        %v329 = vperm.slane %v317, %v328
        %v330 = vrot.slane %v329, 4
        %v331 = vsel %vm201, %v330, %v324
        %v332 = vrot.slane %v324, 4
        %v333 = vsel %vm201, %v329, %v332
        %v335 = vunpack.c.l.s4 1934713408
        %v336 = vunpack.c.0.s8 %v335
        %v337 = vperm.slane %v331, %v336
        %v339 = vunpack.c.l.s4 1934713408
        %v340 = vunpack.c.0.s8 %v339
        %v341 = vperm.slane %v333, %v340
        %v342 = vrot.slane %v337, 4
        %v343 = vsel %vm201, 0, %v342
        %v344 = vrot.slane %v341, 4
        %v345 = vsel %vm201, 0, %v344
        %v348 = vunpack.c.l.s4 1983009808
        %v349 = vunpack.c.0.s8 %v348
        %v350 = vperm.slane %v315, %v349
        %v353 = vunpack.c.l.s4 1983009808
        %v354 = vunpack.c.0.s8 %v353
        %v355 = vperm.slane %v319, %v354
        %v356 = vrot.slane %v355, 4
        %v357 = vsel %vm201, %v356, %v350
        %v358 = vrot.slane %v350, 4
        %v359 = vsel %vm201, %v355, %v358
        %v361 = vunpack.c.l.s4 1934713408
        %v362 = vunpack.c.0.s8 %v361
        %v363 = vperm.slane %v357, %v362
        %v365 = vunpack.c.l.s4 1934713408
        %v366 = vunpack.c.0.s8 %v365
        %v367 = vperm.slane %v359, %v366
        %v368 = vrot.slane %v363, 4
        %v369 = vsel %vm201, 0, %v368
        %v370 = vrot.slane %v367, 4
        %v371 = vsel %vm201, 0, %v370
        %v373 = vunpack.c.l.b16 %v363
        %v374 = vpack.c.b16 %v373, %v373
        %375 = vrot.lane.b32.xlu0 %v374, 16
        %v376 = vpop.permute.xlu0 %375
        %v378 = vunpack.c.l.b16 %v343
        %v379 = vpack.c.b16 %v378, %v378
        %380 = vrot.lane.b32.xlu0 %v379, 32
        %v381 = vpop.permute.xlu0 %380
        %v383 = vunpack.c.l.b16 %v369
        %v384 = vpack.c.b16 %v383, %v383
        %385 = vrot.lane.b32.xlu0 %v384, 48
        %v386 = vpop.permute.xlu0 %385
        %v388 = vunpack.c.l.b16 %v341
        %v389 = vpack.c.b16 %v388, %v388
        %390 = vrot.lane.b32.xlu0 %v389, 64
        %v391 = vpop.permute.xlu0 %390
        %v393 = vunpack.c.l.b16 %v367
        %v394 = vpack.c.b16 %v393, %v393
        %395 = vrot.lane.b32.xlu0 %v394, 80
        %v396 = vpop.permute.xlu0 %395
        %v398 = vunpack.c.l.b16 %v345
        %v399 = vpack.c.b16 %v398, %v398
        %400 = vrot.lane.b32.xlu0 %v399, 96
        %v401 = vpop.permute.xlu0 %400
        %v403 = vunpack.c.l.b16 %v371
        %v404 = vpack.c.b16 %v403, %v403
        %405 = vrot.lane.b32.xlu0 %v404, 112
        %v406 = vpop.permute.xlu0 %405
        %v409 = vsel %vm278, %v337, %v376
        %v411 = vsel %vm282, %v409, %v381
        %v413 = vsel %vm285, %v411, %v386
        %v415 = vsel %vm288, %v413, %v391
        %v417 = vsel %vm291, %v415, %v396
        %v419 = vsel %vm294, %v417, %v401
        %v421 = vsel %vm297, %v419, %v406
        %422 = vrot.lane.b32.xlu0 %v172, 126
        %v423 = vpop.permute.xlu0 %422
        %424 = vrot.lane.b32.xlu0 %v174, 126
        %v425 = vpop.permute.xlu0 %424
        %426 = vrot.lane.b32.xlu0 %v176, 126
        %v427 = vpop.permute.xlu0 %426
        %v430 = vpack.i.b16 %v425, %v423
        %v431 = vshrl.u32 %v423, 16
        %v432 = vshrl.u32 %v425, 16
        %v433 = vpack.i.b16 %v432, %v431
        %v435 = vpack.i.b16 0, %v427
        %v436 = vshrl.u32 %v427, 16
        %v437 = vpack.i.b16 %v188, %v436
        %v440 = vunpack.c.l.s4 1983009808
        %v441 = vunpack.c.0.s8 %v440
        %v442 = vperm.slane %v430, %v441
        %v445 = vunpack.c.l.s4 1983009808
        %v446 = vunpack.c.0.s8 %v445
        %v447 = vperm.slane %v435, %v446
        %v448 = vrot.slane %v447, 4
        %v449 = vsel %vm201, %v448, %v442
        %v450 = vrot.slane %v442, 4
        %v451 = vsel %vm201, %v447, %v450
        %v453 = vunpack.c.l.s4 1934713408
        %v454 = vunpack.c.0.s8 %v453
        %v455 = vperm.slane %v449, %v454
        %v457 = vunpack.c.l.s4 1934713408
        %v458 = vunpack.c.0.s8 %v457
        %v459 = vperm.slane %v451, %v458
        %v460 = vrot.slane %v455, 4
        %v461 = vsel %vm201, 0, %v460
        %v462 = vrot.slane %v459, 4
        %v463 = vsel %vm201, 0, %v462
        %v466 = vunpack.c.l.s4 1983009808
        %v467 = vunpack.c.0.s8 %v466
        %v468 = vperm.slane %v433, %v467
        %v471 = vunpack.c.l.s4 1983009808
        %v472 = vunpack.c.0.s8 %v471
        %v473 = vperm.slane %v437, %v472
        %v474 = vrot.slane %v473, 4
        %v475 = vsel %vm201, %v474, %v468
        %v476 = vrot.slane %v468, 4
        %v477 = vsel %vm201, %v473, %v476
        %v479 = vunpack.c.l.s4 1934713408
        %v480 = vunpack.c.0.s8 %v479
        %v481 = vperm.slane %v475, %v480
        %v483 = vunpack.c.l.s4 1934713408
        %v484 = vunpack.c.0.s8 %v483
        %v485 = vperm.slane %v477, %v484
        %v486 = vrot.slane %v481, 4
        %v487 = vsel %vm201, 0, %v486
        %v488 = vrot.slane %v485, 4
        %v489 = vsel %vm201, 0, %v488
        %v491 = vunpack.c.l.b16 %v481
        %v492 = vpack.c.b16 %v491, %v491
        %493 = vrot.lane.b32.xlu0 %v492, 16
        %v494 = vpop.permute.xlu0 %493
        %v496 = vunpack.c.l.b16 %v461
        %v497 = vpack.c.b16 %v496, %v496
        %498 = vrot.lane.b32.xlu0 %v497, 32
        %v499 = vpop.permute.xlu0 %498
        %v501 = vunpack.c.l.b16 %v487
        %v502 = vpack.c.b16 %v501, %v501
        %503 = vrot.lane.b32.xlu0 %v502, 48
        %v504 = vpop.permute.xlu0 %503
        %v506 = vunpack.c.l.b16 %v459
        %v507 = vpack.c.b16 %v506, %v506
        %508 = vrot.lane.b32.xlu0 %v507, 64
        %v509 = vpop.permute.xlu0 %508
        %v511 = vunpack.c.l.b16 %v485
        %v512 = vpack.c.b16 %v511, %v511
        %513 = vrot.lane.b32.xlu0 %v512, 80
        %v514 = vpop.permute.xlu0 %513
        %v516 = vunpack.c.l.b16 %v463
        %v517 = vpack.c.b16 %v516, %v516
        %518 = vrot.lane.b32.xlu0 %v517, 96
        %v519 = vpop.permute.xlu0 %518
        %v521 = vunpack.c.l.b16 %v489
        %v522 = vpack.c.b16 %v521, %v521
        %523 = vrot.lane.b32.xlu0 %v522, 112
        %v524 = vpop.permute.xlu0 %523
        %v527 = vsel %vm278, %v455, %v494
        %v529 = vsel %vm282, %v527, %v499
        %v531 = vsel %vm285, %v529, %v504
        %v533 = vsel %vm288, %v531, %v509
        %v535 = vsel %vm291, %v533, %v514
        %v537 = vsel %vm294, %v535, %v519
        %v539 = vsel %vm297, %v537, %v524
        %vm540 = vsmask.f32 3328
        %vm541 = vsmask.f32 7440
        %vm542 = vmor %vm540, %vm541
        %v544 = vrot.slane %v181, 4
        %v545 = vshll.u32 %v172, 16
        %v547 = vrot.slane %v545, 5
        %v548 = vor.u32 %v544, %v547
        %v549 = vrot.slane %v548, 4
        %v551 = vshll.u32 %v173, 16
        %v553 = vrot.slane %v551, 5
        %v554 = vsel %vm542, %v549, %v553
        %v556 = vrot.slane %v182, 4
        %v557 = vshll.u32 %v174, 16
        %v559 = vrot.slane %v557, 5
        %v560 = vor.u32 %v556, %v559
        %v561 = vrot.slane %v560, 4
        %v563 = vshll.u32 %v175, 16
        %v565 = vrot.slane %v563, 5
        %v566 = vsel %vm542, %v561, %v565
        %v568 = vrot.slane %v187, 4
        %v569 = vshll.u32 %v176, 16
        %v571 = vrot.slane %v569, 5
        %v572 = vor.u32 %v568, %v571
        %v573 = vrot.slane %v572, 4
        %v575 = vshll.u32 %v177, 16
        %v577 = vrot.slane %v575, 5
        %v578 = vsel %vm542, %v573, %v577
        %v581 = vpack.i.b16 %v566, %v554
        %v582 = vshrl.u32 %v554, 16
        %v583 = vshrl.u32 %v566, 16
        %v584 = vpack.i.b16 %v583, %v582
        %v586 = vpack.i.b16 0, %v578
        %v587 = vshrl.u32 %v578, 16
        %v588 = vpack.i.b16 %v188, %v587
        %v591 = vunpack.c.l.s4 1983009808
        %v592 = vunpack.c.0.s8 %v591
        %v593 = vperm.slane %v581, %v592
        %v596 = vunpack.c.l.s4 1983009808
        %v597 = vunpack.c.0.s8 %v596
        %v598 = vperm.slane %v586, %v597
        %v599 = vrot.slane %v598, 4
        %v600 = vsel %vm201, %v599, %v593
        %v601 = vrot.slane %v593, 4
        %v602 = vsel %vm201, %v598, %v601
        %v604 = vunpack.c.l.s4 1934713408
        %v605 = vunpack.c.0.s8 %v604
        %v606 = vperm.slane %v600, %v605
        %v608 = vunpack.c.l.s4 1934713408
        %v609 = vunpack.c.0.s8 %v608
        %v610 = vperm.slane %v602, %v609
        %v611 = vrot.slane %v606, 4
        %v612 = vsel %vm201, 0, %v611
        %v613 = vrot.slane %v610, 4
        %v614 = vsel %vm201, 0, %v613
        %v617 = vunpack.c.l.s4 1983009808
        %v618 = vunpack.c.0.s8 %v617
        %v619 = vperm.slane %v584, %v618
        %v622 = vunpack.c.l.s4 1983009808
        %v623 = vunpack.c.0.s8 %v622
        %v624 = vperm.slane %v588, %v623
        %v625 = vrot.slane %v624, 4
        %v626 = vsel %vm201, %v625, %v619
        %v627 = vrot.slane %v619, 4
        %v628 = vsel %vm201, %v624, %v627
        %v630 = vunpack.c.l.s4 1934713408
        %v631 = vunpack.c.0.s8 %v630
        %v632 = vperm.slane %v626, %v631
        %v634 = vunpack.c.l.s4 1934713408
        %v635 = vunpack.c.0.s8 %v634
        %v636 = vperm.slane %v628, %v635
        %v637 = vrot.slane %v632, 4
        %v638 = vsel %vm201, 0, %v637
        %v639 = vrot.slane %v636, 4
        %v640 = vsel %vm201, 0, %v639
        %v642 = vunpack.c.l.b16 %v632
        %v643 = vpack.c.b16 %v642, %v642
        %644 = vrot.lane.b32.xlu0 %v643, 16
        %v645 = vpop.permute.xlu0 %644
        %v647 = vunpack.c.l.b16 %v612
        %v648 = vpack.c.b16 %v647, %v647
        %649 = vrot.lane.b32.xlu0 %v648, 32
        %v650 = vpop.permute.xlu0 %649
        %v652 = vunpack.c.l.b16 %v638
        %v653 = vpack.c.b16 %v652, %v652
        %654 = vrot.lane.b32.xlu0 %v653, 48
        %v655 = vpop.permute.xlu0 %654
        %v657 = vunpack.c.l.b16 %v610
        %v658 = vpack.c.b16 %v657, %v657
        %659 = vrot.lane.b32.xlu0 %v658, 64
        %v660 = vpop.permute.xlu0 %659
        %v662 = vunpack.c.l.b16 %v636
        %v663 = vpack.c.b16 %v662, %v662
        %664 = vrot.lane.b32.xlu0 %v663, 80
        %v665 = vpop.permute.xlu0 %664
        %v667 = vunpack.c.l.b16 %v614
        %v668 = vpack.c.b16 %v667, %v667
        %669 = vrot.lane.b32.xlu0 %v668, 96
        %v670 = vpop.permute.xlu0 %669
        %v672 = vunpack.c.l.b16 %v640
        %v673 = vpack.c.b16 %v672, %v672
        %674 = vrot.lane.b32.xlu0 %v673, 112
        %v675 = vpop.permute.xlu0 %674
        %v678 = vsel %vm278, %v606, %v645
        %v680 = vsel %vm282, %v678, %v650
        %v682 = vsel %vm285, %v680, %v655
        %v684 = vsel %vm288, %v682, %v660
        %v686 = vsel %vm291, %v684, %v665
        %v688 = vsel %vm294, %v686, %v670
        %v690 = vsel %vm297, %v688, %v675
        %691 = vrot.lane.b32.xlu0 %v554, 127
        %v692 = vpop.permute.xlu0 %691
        %693 = vrot.lane.b32.xlu0 %v566, 127
        %v694 = vpop.permute.xlu0 %693
        %695 = vrot.lane.b32.xlu0 %v578, 127
        %v696 = vpop.permute.xlu0 %695
        %v699 = vpack.i.b16 %v694, %v692
        %v700 = vshrl.u32 %v692, 16
        %v701 = vshrl.u32 %v694, 16
        %v702 = vpack.i.b16 %v701, %v700
        %v704 = vpack.i.b16 0, %v696
        %v705 = vshrl.u32 %v696, 16
        %v706 = vpack.i.b16 %v188, %v705
        %v709 = vunpack.c.l.s4 1983009808
        %v710 = vunpack.c.0.s8 %v709
        %v711 = vperm.slane %v699, %v710
        %v714 = vunpack.c.l.s4 1983009808
        %v715 = vunpack.c.0.s8 %v714
        %v716 = vperm.slane %v704, %v715
        %v717 = vrot.slane %v716, 4
        %v718 = vsel %vm201, %v717, %v711
        %v719 = vrot.slane %v711, 4
        %v720 = vsel %vm201, %v716, %v719
        %v722 = vunpack.c.l.s4 1934713408
        %v723 = vunpack.c.0.s8 %v722
        %v724 = vperm.slane %v718, %v723
        %v726 = vunpack.c.l.s4 1934713408
        %v727 = vunpack.c.0.s8 %v726
        %v728 = vperm.slane %v720, %v727
        %v729 = vrot.slane %v724, 4
        %v730 = vsel %vm201, 0, %v729
        %v731 = vrot.slane %v728, 4
        %v732 = vsel %vm201, 0, %v731
        %v735 = vunpack.c.l.s4 1983009808
        %v736 = vunpack.c.0.s8 %v735
        %v737 = vperm.slane %v702, %v736
        %v740 = vunpack.c.l.s4 1983009808
        %v741 = vunpack.c.0.s8 %v740
        %v742 = vperm.slane %v706, %v741
        %v743 = vrot.slane %v742, 4
        %v744 = vsel %vm201, %v743, %v737
        %v745 = vrot.slane %v737, 4
        %v746 = vsel %vm201, %v742, %v745
        %v748 = vunpack.c.l.s4 1934713408
        %v749 = vunpack.c.0.s8 %v748
        %v750 = vperm.slane %v744, %v749
        %v752 = vunpack.c.l.s4 1934713408
        %v753 = vunpack.c.0.s8 %v752
        %v754 = vperm.slane %v746, %v753
        %v755 = vrot.slane %v750, 4
        %v756 = vsel %vm201, 0, %v755
        %v757 = vrot.slane %v754, 4
        %v758 = vsel %vm201, 0, %v757
        %v760 = vunpack.c.l.b16 %v750
        %v761 = vpack.c.b16 %v760, %v760
        %762 = vrot.lane.b32.xlu0 %v761, 16
        %v763 = vpop.permute.xlu0 %762
        %v765 = vunpack.c.l.b16 %v730
        %v766 = vpack.c.b16 %v765, %v765
        %767 = vrot.lane.b32.xlu0 %v766, 32
        %v768 = vpop.permute.xlu0 %767
        %v770 = vunpack.c.l.b16 %v756
        %v771 = vpack.c.b16 %v770, %v770
        %772 = vrot.lane.b32.xlu0 %v771, 48
        %v773 = vpop.permute.xlu0 %772
        %v775 = vunpack.c.l.b16 %v728
        %v776 = vpack.c.b16 %v775, %v775
        %777 = vrot.lane.b32.xlu0 %v776, 64
        %v778 = vpop.permute.xlu0 %777
        %v780 = vunpack.c.l.b16 %v754
        %v781 = vpack.c.b16 %v780, %v780
        %782 = vrot.lane.b32.xlu0 %v781, 80
        %v783 = vpop.permute.xlu0 %782
        %v785 = vunpack.c.l.b16 %v732
        %v786 = vpack.c.b16 %v785, %v785
        %787 = vrot.lane.b32.xlu0 %v786, 96
        %v788 = vpop.permute.xlu0 %787
        %v790 = vunpack.c.l.b16 %v758
        %v791 = vpack.c.b16 %v790, %v790
        %792 = vrot.lane.b32.xlu0 %v791, 112
        %v793 = vpop.permute.xlu0 %792
        %v796 = vsel %vm278, %v724, %v763
        %v798 = vsel %vm282, %v796, %v768
        %v800 = vsel %vm285, %v798, %v773
        %v802 = vsel %vm288, %v800, %v778
        %v804 = vsel %vm291, %v802, %v783
        %v806 = vsel %vm294, %v804, %v788
        %v808 = vsel %vm297, %v806, %v793
        %809 = vrot.lane.b32.xlu0 %v554, 126
        %v810 = vpop.permute.xlu0 %809
        %811 = vrot.lane.b32.xlu0 %v566, 126
        %v812 = vpop.permute.xlu0 %811
        %813 = vrot.lane.b32.xlu0 %v578, 126
        %v814 = vpop.permute.xlu0 %813
        %v817 = vpack.i.b16 %v812, %v810
        %v818 = vshrl.u32 %v810, 16
        %v819 = vshrl.u32 %v812, 16
        %v820 = vpack.i.b16 %v819, %v818
        %v822 = vpack.i.b16 0, %v814
        %v823 = vshrl.u32 %v814, 16
        %v824 = vpack.i.b16 %v188, %v823
        %v827 = vunpack.c.l.s4 1983009808
        %v828 = vunpack.c.0.s8 %v827
        %v829 = vperm.slane %v817, %v828
        %v832 = vunpack.c.l.s4 1983009808
        %v833 = vunpack.c.0.s8 %v832
        %v834 = vperm.slane %v822, %v833
        %v835 = vrot.slane %v834, 4
        %v836 = vsel %vm201, %v835, %v829
        %v837 = vrot.slane %v829, 4
        %v838 = vsel %vm201, %v834, %v837
        %v840 = vunpack.c.l.s4 1934713408
        %v841 = vunpack.c.0.s8 %v840
        %v842 = vperm.slane %v836, %v841
        %v844 = vunpack.c.l.s4 1934713408
        %v845 = vunpack.c.0.s8 %v844
        %v846 = vperm.slane %v838, %v845
        %v847 = vrot.slane %v842, 4
        %v848 = vsel %vm201, 0, %v847
        %v849 = vrot.slane %v846, 4
        %v850 = vsel %vm201, 0, %v849
        %v853 = vunpack.c.l.s4 1983009808
        %v854 = vunpack.c.0.s8 %v853
        %v855 = vperm.slane %v820, %v854
        %v858 = vunpack.c.l.s4 1983009808
        %v859 = vunpack.c.0.s8 %v858
        %v860 = vperm.slane %v824, %v859
        %v861 = vrot.slane %v860, 4
        %v862 = vsel %vm201, %v861, %v855
        %v863 = vrot.slane %v855, 4
        %v864 = vsel %vm201, %v860, %v863
        %v866 = vunpack.c.l.s4 1934713408
        %v867 = vunpack.c.0.s8 %v866
        %v868 = vperm.slane %v862, %v867
        %v870 = vunpack.c.l.s4 1934713408
        %v871 = vunpack.c.0.s8 %v870
        %v872 = vperm.slane %v864, %v871
        %v873 = vrot.slane %v868, 4
        %v874 = vsel %vm201, 0, %v873
        %v875 = vrot.slane %v872, 4
        %v876 = vsel %vm201, 0, %v875
        %v878 = vunpack.c.l.b16 %v868
        %v879 = vpack.c.b16 %v878, %v878
        %880 = vrot.lane.b32.xlu0 %v879, 16
        %v881 = vpop.permute.xlu0 %880
        %v883 = vunpack.c.l.b16 %v848
        %v884 = vpack.c.b16 %v883, %v883
        %885 = vrot.lane.b32.xlu0 %v884, 32
        %v886 = vpop.permute.xlu0 %885
        %v888 = vunpack.c.l.b16 %v874
        %v889 = vpack.c.b16 %v888, %v888
        %890 = vrot.lane.b32.xlu0 %v889, 48
        %v891 = vpop.permute.xlu0 %890
        %v893 = vunpack.c.l.b16 %v846
        %v894 = vpack.c.b16 %v893, %v893
        %895 = vrot.lane.b32.xlu0 %v894, 64
        %v896 = vpop.permute.xlu0 %895
        %v898 = vunpack.c.l.b16 %v872
        %v899 = vpack.c.b16 %v898, %v898
        %900 = vrot.lane.b32.xlu0 %v899, 80
        %v901 = vpop.permute.xlu0 %900
        %v903 = vunpack.c.l.b16 %v850
        %v904 = vpack.c.b16 %v903, %v903
        %905 = vrot.lane.b32.xlu0 %v904, 96
        %v906 = vpop.permute.xlu0 %905
        %v908 = vunpack.c.l.b16 %v876
        %v909 = vpack.c.b16 %v908, %v908
        %910 = vrot.lane.b32.xlu0 %v909, 112
        %v911 = vpop.permute.xlu0 %910
        %v914 = vsel %vm278, %v842, %v881
        %v916 = vsel %vm282, %v914, %v886
        %v918 = vsel %vm285, %v916, %v891
        %v920 = vsel %vm288, %v918, %v896
        %v922 = vsel %vm291, %v920, %v901
        %v924 = vsel %vm294, %v922, %v906
        %v926 = vsel %vm297, %v924, %v911
        %vm930 = vcmask 1042432
        %vm931 = vcmask 1046532
        %vm932 = vmor %vm930, %vm931
        %v933 = vrot.slane %v172, 5
        %v934 = vrot.slane %v933, 4
        %v935 = vrot.slane %v173, 5
        %v936 = vsel %vm932, %v934, %v935
        %v937 = vrot.slane %v174, 5
        %v938 = vrot.slane %v937, 4
        %v939 = vrot.slane %v175, 5
        %v940 = vsel %vm932, %v938, %v939
        %v941 = vrot.slane %v176, 5
        %v942 = vrot.slane %v941, 4
        %v943 = vrot.slane %v177, 5
        %v944 = vsel %vm932, %v942, %v943
        %v947 = vpack.i.b16 %v940, %v936
        %v948 = vshrl.u32 %v936, 16
        %v949 = vshrl.u32 %v940, 16
        %v950 = vpack.i.b16 %v949, %v948
        %v952 = vpack.i.b16 0, %v944
        %v953 = vshrl.u32 %v944, 16
        %v954 = vpack.i.b16 %v188, %v953
        %v957 = vunpack.c.l.s4 1983009808
        %v958 = vunpack.c.0.s8 %v957
        %v959 = vperm.slane %v947, %v958
        %v962 = vunpack.c.l.s4 1983009808
        %v963 = vunpack.c.0.s8 %v962
        %v964 = vperm.slane %v952, %v963
        %v965 = vrot.slane %v964, 4
        %v966 = vsel %vm201, %v965, %v959
        %v967 = vrot.slane %v959, 4
        %v968 = vsel %vm201, %v964, %v967
        %v970 = vunpack.c.l.s4 1934713408
        %v971 = vunpack.c.0.s8 %v970
        %v972 = vperm.slane %v966, %v971
        %v974 = vunpack.c.l.s4 1934713408
        %v975 = vunpack.c.0.s8 %v974
        %v976 = vperm.slane %v968, %v975
        %v977 = vrot.slane %v972, 4
        %v978 = vsel %vm201, 0, %v977
        %v979 = vrot.slane %v976, 4
        %v980 = vsel %vm201, 0, %v979
        %v983 = vunpack.c.l.s4 1983009808
        %v984 = vunpack.c.0.s8 %v983
        %v985 = vperm.slane %v950, %v984
        %v988 = vunpack.c.l.s4 1983009808
        %v989 = vunpack.c.0.s8 %v988
        %v990 = vperm.slane %v954, %v989
        %v991 = vrot.slane %v990, 4
        %v992 = vsel %vm201, %v991, %v985
        %v993 = vrot.slane %v985, 4
        %v994 = vsel %vm201, %v990, %v993
        %v996 = vunpack.c.l.s4 1934713408
        %v997 = vunpack.c.0.s8 %v996
        %v998 = vperm.slane %v992, %v997
        %v1000 = vunpack.c.l.s4 1934713408
        %v1001 = vunpack.c.0.s8 %v1000
        %v1002 = vperm.slane %v994, %v1001
        %v1003 = vrot.slane %v998, 4
        %v1004 = vsel %vm201, 0, %v1003
        %v1005 = vrot.slane %v1002, 4
        %v1006 = vsel %vm201, 0, %v1005
        %v1008 = vunpack.c.l.b16 %v998
        %v1009 = vpack.c.b16 %v1008, %v1008
        %1010 = vrot.lane.b32.xlu0 %v1009, 16
        %v1011 = vpop.permute.xlu0 %1010
        %v1013 = vunpack.c.l.b16 %v978
        %v1014 = vpack.c.b16 %v1013, %v1013
        %1015 = vrot.lane.b32.xlu0 %v1014, 32
        %v1016 = vpop.permute.xlu0 %1015
        %v1018 = vunpack.c.l.b16 %v1004
        %v1019 = vpack.c.b16 %v1018, %v1018
        %1020 = vrot.lane.b32.xlu0 %v1019, 48
        %v1021 = vpop.permute.xlu0 %1020
        %v1023 = vunpack.c.l.b16 %v976
        %v1024 = vpack.c.b16 %v1023, %v1023
        %1025 = vrot.lane.b32.xlu0 %v1024, 64
        %v1026 = vpop.permute.xlu0 %1025
        %v1028 = vunpack.c.l.b16 %v1002
        %v1029 = vpack.c.b16 %v1028, %v1028
        %1030 = vrot.lane.b32.xlu0 %v1029, 80
        %v1031 = vpop.permute.xlu0 %1030
        %v1033 = vunpack.c.l.b16 %v980
        %v1034 = vpack.c.b16 %v1033, %v1033
        %1035 = vrot.lane.b32.xlu0 %v1034, 96
        %v1036 = vpop.permute.xlu0 %1035
        %v1038 = vunpack.c.l.b16 %v1006
        %v1039 = vpack.c.b16 %v1038, %v1038
        %1040 = vrot.lane.b32.xlu0 %v1039, 112
        %v1041 = vpop.permute.xlu0 %1040
        %v1044 = vsel %vm278, %v972, %v1011
        %v1046 = vsel %vm282, %v1044, %v1016
        %v1048 = vsel %vm285, %v1046, %v1021
        %v1050 = vsel %vm288, %v1048, %v1026
        %v1052 = vsel %vm291, %v1050, %v1031
        %v1054 = vsel %vm294, %v1052, %v1036
        %v1056 = vsel %vm297, %v1054, %v1041
        %1057 = vrot.lane.b32.xlu0 %v936, 127
        %v1058 = vpop.permute.xlu0 %1057
        %1059 = vrot.lane.b32.xlu0 %v940, 127
        %v1060 = vpop.permute.xlu0 %1059
        %1061 = vrot.lane.b32.xlu0 %v944, 127
        %v1062 = vpop.permute.xlu0 %1061
        %v1065 = vpack.i.b16 %v1060, %v1058
        %v1066 = vshrl.u32 %v1058, 16
        %v1067 = vshrl.u32 %v1060, 16
        %v1068 = vpack.i.b16 %v1067, %v1066
        %v1070 = vpack.i.b16 0, %v1062
        %v1071 = vshrl.u32 %v1062, 16
        %v1072 = vpack.i.b16 %v188, %v1071
        %v1075 = vunpack.c.l.s4 1983009808
        %v1076 = vunpack.c.0.s8 %v1075
        %v1077 = vperm.slane %v1065, %v1076
        %v1080 = vunpack.c.l.s4 1983009808
        %v1081 = vunpack.c.0.s8 %v1080
        %v1082 = vperm.slane %v1070, %v1081
        %v1083 = vrot.slane %v1082, 4
        %v1084 = vsel %vm201, %v1083, %v1077
        %v1085 = vrot.slane %v1077, 4
        %v1086 = vsel %vm201, %v1082, %v1085
        %v1088 = vunpack.c.l.s4 1934713408
        %v1089 = vunpack.c.0.s8 %v1088
        %v1090 = vperm.slane %v1084, %v1089
        %v1092 = vunpack.c.l.s4 1934713408
        %v1093 = vunpack.c.0.s8 %v1092
        %v1094 = vperm.slane %v1086, %v1093
        %v1095 = vrot.slane %v1090, 4
        %v1096 = vsel %vm201, 0, %v1095
        %v1097 = vrot.slane %v1094, 4
        %v1098 = vsel %vm201, 0, %v1097
        %v1101 = vunpack.c.l.s4 1983009808
        %v1102 = vunpack.c.0.s8 %v1101
        %v1103 = vperm.slane %v1068, %v1102
        %v1106 = vunpack.c.l.s4 1983009808
        %v1107 = vunpack.c.0.s8 %v1106
        %v1108 = vperm.slane %v1072, %v1107
        %v1109 = vrot.slane %v1108, 4
        %v1110 = vsel %vm201, %v1109, %v1103
        %v1111 = vrot.slane %v1103, 4
        %v1112 = vsel %vm201, %v1108, %v1111
        %v1114 = vunpack.c.l.s4 1934713408
        %v1115 = vunpack.c.0.s8 %v1114
        %v1116 = vperm.slane %v1110, %v1115
        %v1118 = vunpack.c.l.s4 1934713408
        %v1119 = vunpack.c.0.s8 %v1118
        %v1120 = vperm.slane %v1112, %v1119
        %v1121 = vrot.slane %v1116, 4
        %v1122 = vsel %vm201, 0, %v1121
        %v1123 = vrot.slane %v1120, 4
        %v1124 = vsel %vm201, 0, %v1123
        %v1126 = vunpack.c.l.b16 %v1116
        %v1127 = vpack.c.b16 %v1126, %v1126
        %1128 = vrot.lane.b32.xlu0 %v1127, 16
        %v1129 = vpop.permute.xlu0 %1128
        %v1131 = vunpack.c.l.b16 %v1096
        %v1132 = vpack.c.b16 %v1131, %v1131
        %1133 = vrot.lane.b32.xlu0 %v1132, 32
        %v1134 = vpop.permute.xlu0 %1133
        %v1136 = vunpack.c.l.b16 %v1122
        %v1137 = vpack.c.b16 %v1136, %v1136
        %1138 = vrot.lane.b32.xlu0 %v1137, 48
        %v1139 = vpop.permute.xlu0 %1138
        %v1141 = vunpack.c.l.b16 %v1094
        %v1142 = vpack.c.b16 %v1141, %v1141
        %1143 = vrot.lane.b32.xlu0 %v1142, 64
        %v1144 = vpop.permute.xlu0 %1143
        %v1146 = vunpack.c.l.b16 %v1120
        %v1147 = vpack.c.b16 %v1146, %v1146
        %1148 = vrot.lane.b32.xlu0 %v1147, 80
        %v1149 = vpop.permute.xlu0 %1148
        %v1151 = vunpack.c.l.b16 %v1098
        %v1152 = vpack.c.b16 %v1151, %v1151
        %1153 = vrot.lane.b32.xlu0 %v1152, 96
        %v1154 = vpop.permute.xlu0 %1153
        %v1156 = vunpack.c.l.b16 %v1124
        %v1157 = vpack.c.b16 %v1156, %v1156
        %1158 = vrot.lane.b32.xlu0 %v1157, 112
        %v1159 = vpop.permute.xlu0 %1158
        %v1162 = vsel %vm278, %v1090, %v1129
        %v1164 = vsel %vm282, %v1162, %v1134
        %v1166 = vsel %vm285, %v1164, %v1139
        %v1168 = vsel %vm288, %v1166, %v1144
        %v1170 = vsel %vm291, %v1168, %v1149
        %v1172 = vsel %vm294, %v1170, %v1154
        %v1174 = vsel %vm297, %v1172, %v1159
        %1175 = vrot.lane.b32.xlu0 %v936, 126
        %v1176 = vpop.permute.xlu0 %1175
        %1177 = vrot.lane.b32.xlu0 %v940, 126
        %v1178 = vpop.permute.xlu0 %1177
        %1179 = vrot.lane.b32.xlu0 %v944, 126
        %v1180 = vpop.permute.xlu0 %1179
        %v1183 = vpack.i.b16 %v1178, %v1176
        %v1184 = vshrl.u32 %v1176, 16
        %v1185 = vshrl.u32 %v1178, 16
        %v1186 = vpack.i.b16 %v1185, %v1184
        %v1188 = vpack.i.b16 0, %v1180
        %v1189 = vshrl.u32 %v1180, 16
        %v1190 = vpack.i.b16 %v188, %v1189
        %v1193 = vunpack.c.l.s4 1983009808
        %v1194 = vunpack.c.0.s8 %v1193
        %v1195 = vperm.slane %v1183, %v1194
        %v1198 = vunpack.c.l.s4 1983009808
        %v1199 = vunpack.c.0.s8 %v1198
        %v1200 = vperm.slane %v1188, %v1199
        %v1201 = vrot.slane %v1200, 4
        %v1202 = vsel %vm201, %v1201, %v1195
        %v1203 = vrot.slane %v1195, 4
        %v1204 = vsel %vm201, %v1200, %v1203
        %v1206 = vunpack.c.l.s4 1934713408
        %v1207 = vunpack.c.0.s8 %v1206
        %v1208 = vperm.slane %v1202, %v1207
        %v1210 = vunpack.c.l.s4 1934713408
        %v1211 = vunpack.c.0.s8 %v1210
        %v1212 = vperm.slane %v1204, %v1211
        %v1213 = vrot.slane %v1208, 4
        %v1214 = vsel %vm201, 0, %v1213
        %v1215 = vrot.slane %v1212, 4
        %v1216 = vsel %vm201, 0, %v1215
        %v1219 = vunpack.c.l.s4 1983009808
        %v1220 = vunpack.c.0.s8 %v1219
        %v1221 = vperm.slane %v1186, %v1220
        %v1224 = vunpack.c.l.s4 1983009808
        %v1225 = vunpack.c.0.s8 %v1224
        %v1226 = vperm.slane %v1190, %v1225
        %v1227 = vrot.slane %v1226, 4
        %v1228 = vsel %vm201, %v1227, %v1221
        %v1229 = vrot.slane %v1221, 4
        %v1230 = vsel %vm201, %v1226, %v1229
        %v1232 = vunpack.c.l.s4 1934713408
        %v1233 = vunpack.c.0.s8 %v1232
        %v1234 = vperm.slane %v1228, %v1233
        %v1236 = vunpack.c.l.s4 1934713408
        %v1237 = vunpack.c.0.s8 %v1236
        %v1238 = vperm.slane %v1230, %v1237
        %v1239 = vrot.slane %v1234, 4
        %v1240 = vsel %vm201, 0, %v1239
        %v1241 = vrot.slane %v1238, 4
        %v1242 = vsel %vm201, 0, %v1241
        %v1244 = vunpack.c.l.b16 %v1234
        %v1245 = vpack.c.b16 %v1244, %v1244
        %1246 = vrot.lane.b32.xlu0 %v1245, 16
        %v1247 = vpop.permute.xlu0 %1246
        %v1249 = vunpack.c.l.b16 %v1214
        %v1250 = vpack.c.b16 %v1249, %v1249
        %1251 = vrot.lane.b32.xlu0 %v1250, 32
        %v1252 = vpop.permute.xlu0 %1251
        %v1254 = vunpack.c.l.b16 %v1240
        %v1255 = vpack.c.b16 %v1254, %v1254
        %1256 = vrot.lane.b32.xlu0 %v1255, 48
        %v1257 = vpop.permute.xlu0 %1256
        %v1259 = vunpack.c.l.b16 %v1212
        %v1260 = vpack.c.b16 %v1259, %v1259
        %1261 = vrot.lane.b32.xlu0 %v1260, 64
        %v1262 = vpop.permute.xlu0 %1261
        %v1264 = vunpack.c.l.b16 %v1238
        %v1265 = vpack.c.b16 %v1264, %v1264
        %1266 = vrot.lane.b32.xlu0 %v1265, 80
        %v1267 = vpop.permute.xlu0 %1266
        %v1269 = vunpack.c.l.b16 %v1216
        %v1270 = vpack.c.b16 %v1269, %v1269
        %1271 = vrot.lane.b32.xlu0 %v1270, 96
        %v1272 = vpop.permute.xlu0 %1271
        %v1274 = vunpack.c.l.b16 %v1242
        %v1275 = vpack.c.b16 %v1274, %v1274
        %1276 = vrot.lane.b32.xlu0 %v1275, 112
        %v1277 = vpop.permute.xlu0 %1276
        %v1280 = vsel %vm278, %v1208, %v1247
        %v1282 = vsel %vm282, %v1280, %v1252
        %v1284 = vsel %vm285, %v1282, %v1257
        %v1286 = vsel %vm288, %v1284, %v1262
        %v1288 = vsel %vm291, %v1286, %v1267
        %v1290 = vsel %vm294, %v1288, %v1272
        %v1292 = vsel %vm297, %v1290, %v1277
        %v1293 = vshrl.u32 %v421, 16
        %v1295 = vrot.slane %v1293, 6
        %v1296 = vshll.u32 %v421, 16
        %v1298 = vrot.slane %v1296, 7
        %v1299 = vor.u32 %v1295, %v1298
        %v1302 = vrot.slane %v539, 5
        %v1303 = vshrl.u32 %v690, 16
        %v1305 = vrot.slane %v1303, 3
        %v1306 = vshll.u32 %v690, 16
        %v1308 = vrot.slane %v1306, 4
        %v1309 = vor.u32 %v1305, %v1308
        %v1312 = vrot.slane %v808, 2
        %v1313 = vshll.u32 %v926, 16
        %v1315 = vrot.slane %v1313, 1
        %v1316 = vshrl.u32 %v926, 16
        %v1318 = vor.u32 %v1316, %v1315
        %v1321 = vrot.slane %v1056, 7
        %v1322 = vshrl.u32 %v1174, 16
        %v1324 = vrot.slane %v1322, 5
        %v1325 = vshll.u32 %v1174, 16
        %v1327 = vrot.slane %v1325, 6
        %v1328 = vor.u32 %v1324, %v1327
        %v1331 = vrot.slane %v1292, 4
        %vm1332 = vcmask 1041408
        %vm1333 = vsmask.f32 1280
        %vm1334 = vmand %vm1332, %vm1333
        %v1335 = vsel %vm1334, %v299, %v1299
        %vm1336 = vcmask 1042432
        %v1339 = vsel %vm1336, %v1335, %v1302
        %vm1341 = vcmask 1044480
        %vm1342 = vsmask.f32 4352
        %vm1343 = vmand %vm1341, %vm1342
        %v1344 = vsel %vm1343, %v1339, %v1309
        %vm1345 = vcmask 1045504
        %v1348 = vsel %vm1345, %v1344, %v1312
        %vm1350 = vcmask 1047552
        %vm1351 = vsmask.f32 7424
        %vm1352 = vmand %vm1350, %vm1351
        %v1353 = vsel %vm1352, %v1348, %v1315
        %vm1354 = vcmask 1040384
        %v1357 = vsel %vm1354, %v1318, %v1321
        %vm1359 = vsmask.f32 2304
        %vm1360 = vmand %vm930, %vm1359
        %v1361 = vsel %vm1360, %v1357, %v1328
        %vm1362 = vcmask 1043456
        %v1365 = vsel %vm1362, %v1361, %v1331
        %vm1367 = vcmask 1045504
        %vm1368 = vsmask.f32 5376
        %vm1369 = vmand %vm1367, %vm1368
        %v1370 = vsel %vm1369, %v1365, 0
        %v1371 = vld [vmem:[%s1] sm:$0xf]
        %v1372 = vld [vmem:[%s1 + $0x4] sm:$0xf]
        %v1373 = vld [vmem:[%s1 + $0x8] sm:$0xf]
        %v1374 = vld [vmem:[%s1 + $0xc] sm:$0xf]
        %v1375 = vld [vmem:[%s2] sm:$0xff]
        %v1376 = vld [vmem:[%s2 + $0x8] sm:$0xff]
        %v1377 = vld [vmem:[%s2 + $0x10] sm:$0xff]
        %v1378 = vld [vmem:[%s2 + $0x18] sm:$0xff]
        %1380 = vset.pattern.permute.xlu0 0
        %1381 = vperm.xlu0 %1380, %v1375
        %v1382 = vpop.permute.xlu0 %1381
        %1385 = vset.pattern.permute.xlu0 0
        %1386 = vperm.xlu0 %1385, %v1376
        %v1387 = vpop.permute.xlu0 %1386
        %1390 = vset.pattern.permute.xlu0 0
        %1391 = vperm.xlu0 %1390, %v1377
        %v1392 = vpop.permute.xlu0 %1391
        %1395 = vset.pattern.permute.xlu0 0
        %1396 = vperm.xlu0 %1395, %v1378
        %v1397 = vpop.permute.xlu0 %1396
        %v1403 = vunpack.c.l.b16 %v1371
        %v1404 = vunpack.c.l.b16 %v1372
        %v1405 = vunpack.c.l.b16 %v1373
        %v1406 = vunpack.c.l.b16 %v1374
        %v1407 = vpack.c.b16 %v1404, %v1403
        %v1408 = vpack.c.b16 %v1406, %v1405
        %v1410 = vsel %vm282, %v1407, 0
        %v1413 = vsel %vm282, %v1408, 0
        %1415 = vmatpush.bf16.msra.mxu0 0
        %1416 = vmatpush.bf16.msra.mxu0 0
        %1417 = vmatpush.bf16.msra.mxu0 0
        %1418 = vmatpush.bf16.msra.mxu0 0
        %1419 = vmatpush.bf16.msra.mxu0 0
        %1420 = vmatpush.bf16.msra.mxu0 0
        %1421 = vmatpush.bf16.msra.mxu0 %v1370
        %1422 = vmatpush.bf16.msra.mxu0 %v1353
        %1423 = vmatmul.bf16.gmra.mxu0 %v1410
        %v1424 = vpop.f32.mrf.mxu0
        %v1425 = vadd.f32 %v1382, %v1424
        %v1426 = vpop.f32.mrf.mxu0
        %v1427 = vadd.f32 %v1387, %v1426
        %1428 = vmatmul.bf16.gmra.mxu0 %v1413
        %v1429 = vpop.f32.mrf.mxu0
        %v1430 = vadd.f32 %v1392, %v1429
        %v1431 = vpop.f32.mrf.mxu0
        %v1432 = vadd.f32 %v1397, %v1431
        %1433 = vdwg.mxu0
        %v1434 = vmax.f32 %v1425, 0.0
        %v1435 = vmax.f32 %v1427, 0.0
        %v1436 = vmax.f32 %v1430, 0.0
        %v1437 = vmax.f32 %v1432, 0.0
        %1438 = vst [vmem:[%s165] sm:$0xff] %v1434
        %1439 = vst [vmem:[%s165 + $0x8] sm:$0xff] %v1435
        %1440 = vst [vmem:[%s165 + $0x10] sm:$0xff] %v1436
        %1441 = vst [vmem:[%s165 + $0x18] sm:$0xff] %v1437
        %s1442 = sand.u32 %s89, 1
        %s1443 = scalar_lea.sflag [#allocation4], %s1442
        %s1444 = sand.u32 %s89, 1
        %s1445 = smul.addr %s1444, 32
        %s1446 = scalar_lea.vmem [#allocation5], %s1445
        // Predicated region
        $region37: #{tpu_custom_call.1} parent=31 // pred_check
          %p1447 = pneg %p99
        $region38: #{tpu_custom_call.1} parent=31 // pred_check_branch
          %1449 = sbr.rel (%p1447) target = $region40
        $region39: #{tpu_custom_call.1} parent=31 // pred_region
          %1451 = vsyncadd %s1443, 0
          %s1452 = smul.addr %s18, 8
          %s1453 = scalar_lea.hbm %s3, %s1452
          %s1454 = sshll.u32 %s1446, 4
          %s1455 = int_to_ptr.vmem [resolvable:$true] %s1454
          %s1456 = sshll.u32 %s1453, 4
          %s1457 = int_to_ptr.hbm [resolvable:$true] %s1456
          %1462 = dma.vmem_to_hbm [thread:$0]  %s1455, 512, %s1457, %s1443, 128, 256, 8
        $region40: #{tpu_custom_call.1} parent=31 // pred_fallthru
          _
      $region32: #{tpu_custom_call.1} parent=5 // pred_fallthru
        _
      %p1463 = scmp.le.s32.totalorder 2, %s13
      // Predicated region
      $region41: #{tpu_custom_call.1} parent=5 // pred_check
        %p1464 = pneg %p1463
      $region42: #{tpu_custom_call.1} parent=5 // pred_check_branch
        %1466 = sbr.rel (%p1464) target = $region44
      $region43: #{tpu_custom_call.1} parent=5 // pred_region
        %s1467 = ssub.s32 %s13, 2
        // Predicated region
        $region45: #{tpu_custom_call.1} parent=43 // pred_check
          %p1468 = pneg %p105
        $region46: #{tpu_custom_call.1} parent=43 // pred_check_branch
          %1470 = sbr.rel (%p1468) target = $region48
        $region47: #{tpu_custom_call.1} parent=43 // pred_region
          %s1471 = sand.u32 %s90, 1
          %s1472 = scalar_lea.sflag [#allocation4], %s1471
          %s1473 = sand.u32 %s90, 1
          %s1474 = smul.addr %s1473, 32
          %s1475 = scalar_lea.vmem [#allocation5], %s1474
          %1477 = dma.done %s1472, 512
        $region48: #{tpu_custom_call.1} parent=43 // pred_fallthru
          _
      $region44: #{tpu_custom_call.1} parent=5 // pred_fallthru
        _
    $region6: #{tpu_custom_call.1} parent=1 // loop_footer
      %s17 = sadd.s32 1, %s13
    $region7: #{tpu_custom_call.1} parent=1 // loop_footer_branch
      %12 = sbr.rel target = $region3
    $region8: #{tpu_custom_call.1} parent=1 // loop_exit
      _
    %1478 = vsyncpa [#allocation3], 1
    %s1479 = scalar_lea.sflag [#allocation3], 1
    %1480 = vsyncpa %s1479, 1
    %1481 = vsyncpa [#allocation4], 1
    %s1482 = scalar_lea.sflag [#allocation4], 1
    %1483 = vsyncpa %s1482, 1

</llo_original>
